<compile_context>
chip_gen: v5e
topology: v5e:2x2
jax: 0.10.0
libtpu: 0.0.40
codegen_flags: <defaults>
</compile_context>

<pallas_src>
import jax
import jax.numpy as jnp
from jax.experimental import pallas as pl
from jax.experimental.pallas import tpu as pltpu


def _astp_kernel(mask_ref, x_ref, w1_ref, w2_ref, wm_ref, ws_ref, aff_ref,
                 o_ref):
    """One grid step = one block of B_blk batch elements, each an (F, Tp) tile."""
    w1 = w1_ref[...]            # (Bot, F)  bf16
    w2 = w2_ref[...]            # (F, Bot)  bf16
    wm = wm_ref[...]            # (F, F)    bf16  (= W_out[:, :F])
    ws = ws_ref[...]            # (F, F)    bf16  (= W_out[:, F:])
    aff = aff_ref[...]          # (F, 3)    f32:  [b_out | gamma | beta]
    bout = aff[:, 0:1]
    gamma = aff[:, 1:2]
    beta = aff[:, 2:3]

    b_blk = x_ref.shape[0]
    for b in range(b_blk):      # static unroll over the batch block
        m = mask_ref[b]                                   # (1, Tp) f32: 1=keep
        keep = m > 0.0                                    # (1, Tp) bool
        x_bf = x_ref[b] * m.astype(jnp.bfloat16)          # (F, Tp) bf16, masked
        x = x_bf.astype(jnp.float32)                      # f32 copy for stats

        # alpha = tanh(linear1(x))   (Conv1d k=1, no bias)  => tanh(W1 @ x)
        h = jnp.dot(w1, x_bf, preferred_element_type=jnp.float32)   # (Bot, Tp)
        alpha = jnp.tanh(h).astype(jnp.bfloat16)

        # logits = linear2(alpha), masked to -1000 on padded frames; softmax
        # over the time axis (lanes).
        logits = jnp.dot(w2, alpha, preferred_element_type=jnp.float32)  # (F, Tp)
        logits = jnp.where(keep, logits, -1000.0)
        logits = logits - jnp.max(logits, axis=-1, keepdims=True)
        e = jnp.exp(logits)
        a = e * pl.reciprocal(jnp.sum(e, axis=-1, keepdims=True), approx=True)

        # NOTE: reproduced exactly as written in the PyTorch module — no sum
        # over time, so "mean"/"std" are per-frame quantities of shape (F, Tp).
        mean = a * x
        var = a * (1.0 - a) * x * x           # == a*x^2 - (a*x)^2, >= 0
        std = jnp.sqrt(var + 1e-5)

        # out = Linear(2F -> F) per frame:  W_m @ mean + W_s @ std + b_out
        y = (jnp.dot(wm, mean.astype(jnp.bfloat16),
                     preferred_element_type=jnp.float32)
             + jnp.dot(ws, std.astype(jnp.bfloat16),
                       preferred_element_type=jnp.float32)
             + bout)                                       # (F, Tp)

        # LayerNorm over the feature dim (axis 0 / sublanes), eps = 1e-5.
        mu = jnp.mean(y, axis=0, keepdims=True)
        var_ln = jnp.mean((y - mu) * (y - mu), axis=0, keepdims=True)
        y_norm = (y - mu) * jax.lax.rsqrt(var_ln + 1e-5)
        o_ref[b] = (y_norm * gamma + beta).astype(o_ref.dtype)


def _vmem_capacity_bytes():
    """Physical VMEM for the current generation, with a conservative fallback."""
    try:
        return int(pltpu.get_tpu_info().vmem_capacity_bytes)
    except Exception:
        return 64 * 2 ** 20          # assume the smallest (v7x) if unavailable


def _vmem_estimate(b_blk, feat, t_pad, bot):
    """Rough per-step VMEM footprint (bytes) for a (b_blk, F, Tp) block."""
    x_buf = b_blk * feat * t_pad * 2          # bf16 input block
    o_buf = b_blk * feat * t_pad * 4          # f32 output block
    m_buf = b_blk * t_pad * 4                 # f32 mask block
    io = 2 * (x_buf + o_buf + m_buf)          # double-buffered pipelined I/O
    wts = 2 * (2 * (bot * feat + feat * feat) * 2 + feat * 3 * 4)
    live = (8 * feat + 2 * bot) * t_pad * 4   # per-b in-kernel temporaries
    return io + wts + live


def _pick_b_blk(batch, feat, t_pad, bot, budget):
    """Largest batch block (<=8) that fits the budget and keeps >=2 grid steps."""
    if batch <= 1:
        b_blk = 1
    else:
        b_blk = max(1, min(8, (batch + 1) // 2))
    while b_blk > 1 and _vmem_estimate(b_blk, feat, t_pad, bot) > budget:
        b_blk -= 1
    if _vmem_estimate(b_blk, feat, t_pad, bot) > budget:
        raise ValueError(
            f"ASTP tile (F={feat}, Tp={t_pad}) does not fit the VMEM budget "
            f"({budget} bytes) even with B_blk=1; a T-tiled two-pass softmax "
            "variant is required for this shape.")
    return b_blk


def astp_forward(x, padding_mask, params):
    """x: (B, F, T) f32, padding_mask: (B, T) bool (True = padded)."""
    B, F, T = x.shape
    Bot = params["w1"].shape[0]

    # Lane-dense time axis: pad T to a multiple of 128 (padded frames are
    # masked exactly like real padded frames, so results are unchanged).
    Tp = pl.cdiv(T, 128) * 128

    # bf16 HBM input (MXU consumes bf16 anyway); halves kernel read traffic.
    x_bf = x.astype(jnp.bfloat16)
    if Tp != T:
        x_bf = jnp.pad(x_bf, ((0, 0), (0, 0), (0, Tp - T)))
        padding_mask = jnp.pad(padding_mask, ((0, 0), (0, Tp - T)),
                               constant_values=True)

    # Generation-aware VMEM budget and batch-block size.
    budget = int(0.8 * _vmem_capacity_bytes())
    B_blk = _pick_b_blk(B, F, Tp, Bot, budget)
    n_blocks = pl.cdiv(B, B_blk)
    B_pad = n_blocks * B_blk
    if B_pad != B:
        # Extra rows are fully padded; their outputs are sliced off below.
        x_bf = jnp.pad(x_bf, ((0, B_pad - B), (0, 0), (0, 0)))
        padding_mask = jnp.pad(padding_mask, ((0, B_pad - B), (0, 0)),
                               constant_values=True)

    mask = (1.0 - padding_mask.astype(jnp.float32)).reshape(B_pad, 1, Tp)

    # bf16 weights for MXU-native matmuls (f32 accumulation in-kernel).
    w1 = params["w1"].astype(jnp.bfloat16)               # (Bot, F)
    w2 = params["w2"].astype(jnp.bfloat16)               # (F, Bot)
    w_m = params["w_out"][:, :F].astype(jnp.bfloat16)    # (F, F)
    w_s = params["w_out"][:, F:].astype(jnp.bfloat16)    # (F, F)
    affine = jnp.stack(
        [params["b_out"], params["gamma"], params["beta"]],
        axis=1).astype(jnp.float32)                      # (F, 3)

    vmem_limit = int(min(budget,
                         max(32 * 2 ** 20,
                             2 * _vmem_estimate(B_blk, F, Tp, Bot))))

    out = pl.pallas_call(
        _astp_kernel,
        out_shape=jax.ShapeDtypeStruct((B_pad, F, Tp), jnp.float32),
        grid_spec=pltpu.PrefetchScalarGridSpec(
            num_scalar_prefetch=0,
            grid=(n_blocks,),
            in_specs=[
                pl.BlockSpec((B_blk, 1, Tp), lambda i: (i, 0, 0)),   # mask
                pl.BlockSpec((B_blk, F, Tp), lambda i: (i, 0, 0)),   # x (bf16)
                pl.BlockSpec((Bot, F), lambda i: (0, 0)),            # W1
                pl.BlockSpec((F, Bot), lambda i: (0, 0)),            # W2
                pl.BlockSpec((F, F), lambda i: (0, 0)),              # W_out[:, :F]
                pl.BlockSpec((F, F), lambda i: (0, 0)),              # W_out[:, F:]
                pl.BlockSpec((F, 3), lambda i: (0, 0)),              # [b_out|gamma|beta]
            ],
            out_specs=pl.BlockSpec((B_blk, F, Tp), lambda i: (i, 0, 0)),
        ),
        compiler_params=pltpu.CompilerParams(
            dimension_semantics=("parallel",),
            vmem_limit_bytes=vmem_limit),
    )(mask, x_bf, w1, w2, w_m, w_s, affine)

    if B_pad != B or Tp != T:
        out = out[:B, :, :T]
    return out


def astp_reference(x, padding_mask, params):
    """Pure-JAX f32 mirror of the PyTorch forward (for correctness check)."""
    mask = (1.0 - padding_mask.astype(jnp.float32))[:, None, :]        # (B,1,T)
    x = x * mask
    alpha = jnp.tanh(jnp.einsum("of,bft->bot", params["w1"], x))
    logits = jnp.einsum("fo,bot->bft", params["w2"], alpha)
    logits = logits * mask + (1.0 - mask) * (-1000.0)
    a = jax.nn.softmax(logits, axis=2)
    mean = a * x
    var = a * x ** 2 - mean ** 2
    std = jnp.sqrt(var + 1e-5)
    cated = jnp.concatenate([mean, std], axis=1).transpose(0, 2, 1)    # (B,T,2F)
    y = cated @ params["w_out"].T + params["b_out"]                    # (B,T,F)
    mu = jnp.mean(y, axis=-1, keepdims=True)
    v = jnp.mean((y - mu) ** 2, axis=-1, keepdims=True)
    y = (y - mu) / jnp.sqrt(v + 1e-5)
    y = y * params["gamma"] + params["beta"]
    return y.transpose(0, 2, 1)                                        # (B,F,T)


def init_params(key, in_dim, bottleneck_dim):
    k1, k2, k3, k4 = jax.random.split(key, 4)
    return {
        # Conv1d(in_dim, bottleneck, 1, bias=False) -> weight (bot, in_dim)
        "w1": jax.random.normal(k1, (bottleneck_dim, in_dim), jnp.float32) * 0.1,
        # Conv1d(bottleneck, in_dim, 1, bias=False) -> weight (in_dim, bot)
        "w2": jax.random.normal(k2, (in_dim, bottleneck_dim), jnp.float32) * 0.1,
        # Linear(2*in_dim, in_dim)
        "w_out": jax.random.normal(k3, (in_dim, 2 * in_dim), jnp.float32) * 0.1,
        "b_out": jax.random.normal(k4, (in_dim,), jnp.float32) * 0.1,
        # LayerNorm(in_dim)
        "gamma": jnp.ones((in_dim,), jnp.float32),
        "beta": jnp.zeros((in_dim,), jnp.float32),
    }


if __name__ == "__main__":
    B, F_DIM, T = 4, 16, 12      # batch, in_dim (features), time
    BOT = 32                     # bottleneck_dim

    key = jax.random.PRNGKey(0)
    kx, kp = jax.random.split(key)
    x = jax.random.normal(kx, (B, F_DIM, T), jnp.float32)
    # padding_mask: True = padded frame
    padding_mask = jnp.zeros((B, T), jnp.bool_)
    padding_mask = padding_mask.at[1, T - 3:].set(True)
    padding_mask = padding_mask.at[3, T - 5:].set(True)

    params = init_params(kp, F_DIM, BOT)

    out = astp_forward(x, padding_mask, params)
    out = jax.block_until_ready(out)

    ref = astp_reference(x, padding_mask, params)
    assert out.shape == (B, F_DIM, T)
    # bf16 input/MXU + approx EUP reciprocal => compare at bf16-level tolerance.
    max_err = float(jnp.max(jnp.abs(out - ref)))
    assert jnp.allclose(out, ref, atol=5e-2, rtol=5e-2), max_err

    print("KERNEL_OK")
</pallas_src>

<mosaic_0001>
module attributes {stable_mosaic.version = 11 : i64} {
  func.func @_astp_kernel(%arg0: i32, %arg1: memref<2x1x128xf32, #tpu.memory_space<vmem>>, %arg2: memref<2x16x128xbf16, #tpu.memory_space<vmem>>, %arg3: memref<32x16xbf16, #tpu.memory_space<vmem>>, %arg4: memref<16x32xbf16, #tpu.memory_space<vmem>>, %arg5: memref<16x16xbf16, #tpu.memory_space<vmem>>, %arg6: memref<16x16xbf16, #tpu.memory_space<vmem>>, %arg7: memref<16x3xf32, #tpu.memory_space<vmem>>, %arg8: memref<2x16x128xf32, #tpu.memory_space<vmem>>) attributes {dimension_semantics = [#tpu.dimension_semantics<parallel>], iteration_bounds = array<i64: 2>, scalar_prefetch = 0 : i64, scratch_operands = 0 : i64, tpu.core_type = #tpu.core_type<tc>, window_params = [{transform_indices = @transform_0, window_bounds = array<i64: 2, 1, 128>}, {transform_indices = @transform_1, window_bounds = array<i64: 2, 16, 128>}, {pipeline_mode = #tpu.pipeline_mode<synchronous>, transform_indices = @transform_2, window_bounds = array<i64: 32, 16>}, {pipeline_mode = #tpu.pipeline_mode<synchronous>, transform_indices = @transform_3, window_bounds = array<i64: 16, 32>}, {pipeline_mode = #tpu.pipeline_mode<synchronous>, transform_indices = @transform_4, window_bounds = array<i64: 16, 16>}, {pipeline_mode = #tpu.pipeline_mode<synchronous>, transform_indices = @transform_5, window_bounds = array<i64: 16, 16>}, {pipeline_mode = #tpu.pipeline_mode<synchronous>, transform_indices = @transform_6, window_bounds = array<i64: 16, 3>}, {transform_indices = @transform_7, window_bounds = array<i64: 2, 16, 128>}]} {
    %c0 = arith.constant 0 : index
    %c0_0 = arith.constant 0 : index
    %0 = vector.load %arg3[%c0, %c0_0] : memref<32x16xbf16, #tpu.memory_space<vmem>>, vector<32x16xbf16>
    %c0_1 = arith.constant 0 : index
    %c0_2 = arith.constant 0 : index
    %1 = vector.load %arg4[%c0_1, %c0_2] : memref<16x32xbf16, #tpu.memory_space<vmem>>, vector<16x32xbf16>
    %c0_3 = arith.constant 0 : index
    %c0_4 = arith.constant 0 : index
    %2 = vector.load %arg5[%c0_3, %c0_4] : memref<16x16xbf16, #tpu.memory_space<vmem>>, vector<16x16xbf16>
    %c0_5 = arith.constant 0 : index
    %c0_6 = arith.constant 0 : index
    %3 = vector.load %arg6[%c0_5, %c0_6] : memref<16x16xbf16, #tpu.memory_space<vmem>>, vector<16x16xbf16>
    %c0_7 = arith.constant 0 : index
    %c0_8 = arith.constant 0 : index
    %4 = vector.load %arg7[%c0_7, %c0_8] : memref<16x3xf32, #tpu.memory_space<vmem>>, vector<16x3xf32>
    %5 = vector.extract_strided_slice %4 {offsets = [0, 0], sizes = [16, 1], strides = [1, 1]} : vector<16x3xf32> to vector<16x1xf32>
    %6 = vector.extract_strided_slice %4 {offsets = [0, 1], sizes = [16, 1], strides = [1, 1]} : vector<16x3xf32> to vector<16x1xf32>
    %7 = vector.extract_strided_slice %4 {offsets = [0, 2], sizes = [16, 1], strides = [1, 1]} : vector<16x3xf32> to vector<16x1xf32>
    %c0_9 = arith.constant 0 : index
    %c0_10 = arith.constant 0 : index
    %c0_11 = arith.constant 0 : index
    %8 = vector.load %arg1[%c0_9, %c0_10, %c0_11] : memref<2x1x128xf32, #tpu.memory_space<vmem>>, vector<1x1x128xf32>
    %9 = vector.shape_cast %8 : vector<1x1x128xf32> to vector<1x128xf32>
    %cst = arith.constant 0.000000e+00 : f32
    %10 = vector.broadcast %cst : f32 to vector<1x128xf32>
    %11 = arith.cmpf ogt, %9, %10 : vector<1x128xf32>
    %c0_12 = arith.constant 0 : index
    %c0_13 = arith.constant 0 : index
    %c0_14 = arith.constant 0 : index
    %12 = vector.load %arg2[%c0_12, %c0_13, %c0_14] : memref<2x16x128xbf16, #tpu.memory_space<vmem>>, vector<1x16x128xbf16>
    %13 = vector.shape_cast %12 : vector<1x16x128xbf16> to vector<16x128xbf16>
    %14 = arith.truncf %9 : vector<1x128xf32> to vector<1x128xbf16>
    %15 = vector.broadcast %14 : vector<1x128xbf16> to vector<16x128xbf16>
    %16 = arith.mulf %13, %15 : vector<16x128xbf16>
    %17 = arith.extf %16 : vector<16x128xbf16> to vector<16x128xf32>
    %cst_15 = arith.constant dense<0.000000e+00> : vector<32x128xf32>
    %18 = tpu.matmul %0, %16, %cst_15 {dimension_numbers = #tpu.dot_dimension_numbers<[1], [0], [0], [1], [0, 0, 1, 1], [], []>} : vector<32x16xbf16>, vector<16x128xbf16>, vector<32x128xf32> -> vector<32x128xf32>
    %19 = math.tanh %18 : vector<32x128xf32>
    %20 = arith.truncf %19 : vector<32x128xf32> to vector<32x128xbf16>
    %cst_16 = arith.constant dense<0.000000e+00> : vector<16x128xf32>
    %21 = tpu.matmul %1, %20, %cst_16 {dimension_numbers = #tpu.dot_dimension_numbers<[1], [0], [0], [1], [0, 0, 1, 1], [], []>} : vector<16x32xbf16>, vector<32x128xbf16>, vector<16x128xf32> -> vector<16x128xf32>
    %cst_17 = arith.constant -1.000000e+03 : f32
    %22 = vector.shape_cast %11 : vector<1x128xi1> to vector<1x128xi1>
    %23 = vector.broadcast %22 : vector<1x128xi1> to vector<16x128xi1>
    %24 = vector.broadcast %cst_17 : f32 to vector<16x128xf32>
    %25 = arith.select %23, %21, %24 : vector<16x128xi1>, vector<16x128xf32>
    %cst_18 = arith.constant dense<0xFF800000> : vector<16xf32>
    %26 = vector.multi_reduction <maximumf>, %25, %cst_18 [1] : vector<16x128xf32> to vector<16xf32>
    %27 = vector.shape_cast %26 : vector<16xf32> to vector<16x1xf32>
    %28 = vector.broadcast %27 : vector<16x1xf32> to vector<16x128xf32>
    %29 = arith.subf %25, %28 : vector<16x128xf32>
    %30 = math.exp %29 : vector<16x128xf32>
    %cst_19 = arith.constant dense<0.000000e+00> : vector<16xf32>
    %31 = vector.multi_reduction <add>, %30, %cst_19 [1] : vector<16x128xf32> to vector<16xf32>
    %32 = vector.shape_cast %31 : vector<16xf32> to vector<16x1xf32>
    %33 = tpu.reciprocal %32 {approx = true} : vector<16x1xf32> -> vector<16x1xf32>
    %34 = vector.broadcast %33 : vector<16x1xf32> to vector<16x128xf32>
    %35 = arith.mulf %30, %34 : vector<16x128xf32>
    %36 = arith.mulf %35, %17 : vector<16x128xf32>
    %cst_20 = arith.constant 1.000000e+00 : f32
    %37 = vector.broadcast %cst_20 : f32 to vector<16x128xf32>
    %38 = arith.subf %37, %35 : vector<16x128xf32>
    %39 = arith.mulf %35, %38 : vector<16x128xf32>
    %40 = arith.mulf %39, %17 : vector<16x128xf32>
    %41 = arith.mulf %40, %17 : vector<16x128xf32>
    %cst_21 = arith.constant 9.99999974E-6 : f32
    %42 = vector.broadcast %cst_21 : f32 to vector<16x128xf32>
    %43 = arith.addf %41, %42 : vector<16x128xf32>
    %44 = math.sqrt %43 : vector<16x128xf32>
    %45 = arith.truncf %36 : vector<16x128xf32> to vector<16x128xbf16>
    %cst_22 = arith.constant dense<0.000000e+00> : vector<16x128xf32>
    %46 = tpu.matmul %2, %45, %cst_22 {dimension_numbers = #tpu.dot_dimension_numbers<[1], [0], [0], [1], [0, 0, 1, 1], [], []>} : vector<16x16xbf16>, vector<16x128xbf16>, vector<16x128xf32> -> vector<16x128xf32>
    %47 = arith.truncf %44 : vector<16x128xf32> to vector<16x128xbf16>
    %cst_23 = arith.constant dense<0.000000e+00> : vector<16x128xf32>
    %48 = tpu.matmul %3, %47, %cst_23 {dimension_numbers = #tpu.dot_dimension_numbers<[1], [0], [0], [1], [0, 0, 1, 1], [], []>} : vector<16x16xbf16>, vector<16x128xbf16>, vector<16x128xf32> -> vector<16x128xf32>
    %49 = arith.addf %46, %48 : vector<16x128xf32>
    %50 = vector.broadcast %5 : vector<16x1xf32> to vector<16x128xf32>
    %51 = arith.addf %49, %50 : vector<16x128xf32>
    %cst_24 = arith.constant dense<0.000000e+00> : vector<128xf32>
    %52 = vector.multi_reduction <add>, %51, %cst_24 [0] : vector<16x128xf32> to vector<128xf32>
    %53 = vector.shape_cast %52 : vector<128xf32> to vector<1x128xf32>
    %cst_25 = arith.constant 1.600000e+01 : f32
    %54 = vector.broadcast %cst_25 : f32 to vector<1x128xf32>
    %55 = arith.divf %53, %54 : vector<1x128xf32>
    %56 = vector.broadcast %55 : vector<1x128xf32> to vector<16x128xf32>
    %57 = arith.subf %51, %56 : vector<16x128xf32>
    %58 = vector.broadcast %55 : vector<1x128xf32> to vector<16x128xf32>
    %59 = arith.subf %51, %58 : vector<16x128xf32>
    %60 = arith.mulf %57, %59 : vector<16x128xf32>
    %cst_26 = arith.constant dense<0.000000e+00> : vector<128xf32>
    %61 = vector.multi_reduction <add>, %60, %cst_26 [0] : vector<16x128xf32> to vector<128xf32>
    %62 = vector.shape_cast %61 : vector<128xf32> to vector<1x128xf32>
    %cst_27 = arith.constant 1.600000e+01 : f32
    %63 = vector.broadcast %cst_27 : f32 to vector<1x128xf32>
    %64 = arith.divf %62, %63 : vector<1x128xf32>
    %65 = vector.broadcast %55 : vector<1x128xf32> to vector<16x128xf32>
    %66 = arith.subf %51, %65 : vector<16x128xf32>
    %cst_28 = arith.constant 9.99999974E-6 : f32
    %67 = vector.broadcast %cst_28 : f32 to vector<1x128xf32>
    %68 = arith.addf %64, %67 : vector<1x128xf32>
    %69 = math.rsqrt %68 : vector<1x128xf32>
    %70 = vector.broadcast %69 : vector<1x128xf32> to vector<16x128xf32>
    %71 = arith.mulf %66, %70 : vector<16x128xf32>
    %72 = vector.broadcast %6 : vector<16x1xf32> to vector<16x128xf32>
    %73 = arith.mulf %71, %72 : vector<16x128xf32>
    %74 = vector.broadcast %7 : vector<16x1xf32> to vector<16x128xf32>
    %75 = arith.addf %73, %74 : vector<16x128xf32>
    %c0_29 = arith.constant 0 : index
    %c0_30 = arith.constant 0 : index
    %c0_31 = arith.constant 0 : index
    %76 = vector.load %arg8[%c0_29, %c0_30, %c0_31] : memref<2x16x128xf32, #tpu.memory_space<vmem>>, vector<1x16x128xf32>
    %77 = vector.shape_cast %76 : vector<1x16x128xf32> to vector<16x128xf32>
    %78 = vector.shape_cast %75 : vector<16x128xf32> to vector<1x16x128xf32>
    tpu.vector_store %arg8[%c0_29, %c0_30, %c0_31], %78 {strides = array<i32>} : memref<2x16x128xf32, #tpu.memory_space<vmem>>, vector<1x16x128xf32>,
    %c1 = arith.constant 1 : index
    %c0_32 = arith.constant 0 : index
    %c0_33 = arith.constant 0 : index
    %79 = vector.load %arg1[%c1, %c0_32, %c0_33] : memref<2x1x128xf32, #tpu.memory_space<vmem>>, vector<1x1x128xf32>
    %80 = vector.shape_cast %79 : vector<1x1x128xf32> to vector<1x128xf32>
    %cst_34 = arith.constant 0.000000e+00 : f32
    %81 = vector.broadcast %cst_34 : f32 to vector<1x128xf32>
    %82 = arith.cmpf ogt, %80, %81 : vector<1x128xf32>
    %c1_35 = arith.constant 1 : index
    %c0_36 = arith.constant 0 : index
    %c0_37 = arith.constant 0 : index
    %83 = vector.load %arg2[%c1_35, %c0_36, %c0_37] : memref<2x16x128xbf16, #tpu.memory_space<vmem>>, vector<1x16x128xbf16>
    %84 = vector.shape_cast %83 : vector<1x16x128xbf16> to vector<16x128xbf16>
    %85 = arith.truncf %80 : vector<1x128xf32> to vector<1x128xbf16>
    %86 = vector.broadcast %85 : vector<1x128xbf16> to vector<16x128xbf16>
    %87 = arith.mulf %84, %86 : vector<16x128xbf16>
    %88 = arith.extf %87 : vector<16x128xbf16> to vector<16x128xf32>
    %cst_38 = arith.constant dense<0.000000e+00> : vector<32x128xf32>
    %89 = tpu.matmul %0, %87, %cst_38 {dimension_numbers = #tpu.dot_dimension_numbers<[1], [0], [0], [1], [0, 0, 1, 1], [], []>} : vector<32x16xbf16>, vector<16x128xbf16>, vector<32x128xf32> -> vector<32x128xf32>
    %90 = math.tanh %89 : vector<32x128xf32>
    %91 = arith.truncf %90 : vector<32x128xf32> to vector<32x128xbf16>
    %cst_39 = arith.constant dense<0.000000e+00> : vector<16x128xf32>
    %92 = tpu.matmul %1, %91, %cst_39 {dimension_numbers = #tpu.dot_dimension_numbers<[1], [0], [0], [1], [0, 0, 1, 1], [], []>} : vector<16x32xbf16>, vector<32x128xbf16>, vector<16x128xf32> -> vector<16x128xf32>
    %cst_40 = arith.constant -1.000000e+03 : f32
    %93 = vector.shape_cast %82 : vector<1x128xi1> to vector<1x128xi1>
    %94 = vector.broadcast %93 : vector<1x128xi1> to vector<16x128xi1>
    %95 = vector.broadcast %cst_40 : f32 to vector<16x128xf32>
    %96 = arith.select %94, %92, %95 : vector<16x128xi1>, vector<16x128xf32>
    %cst_41 = arith.constant dense<0xFF800000> : vector<16xf32>
    %97 = vector.multi_reduction <maximumf>, %96, %cst_41 [1] : vector<16x128xf32> to vector<16xf32>
    %98 = vector.shape_cast %97 : vector<16xf32> to vector<16x1xf32>
    %99 = vector.broadcast %98 : vector<16x1xf32> to vector<16x128xf32>
    %100 = arith.subf %96, %99 : vector<16x128xf32>
    %101 = math.exp %100 : vector<16x128xf32>
    %cst_42 = arith.constant dense<0.000000e+00> : vector<16xf32>
    %102 = vector.multi_reduction <add>, %101, %cst_42 [1] : vector<16x128xf32> to vector<16xf32>
    %103 = vector.shape_cast %102 : vector<16xf32> to vector<16x1xf32>
    %104 = tpu.reciprocal %103 {approx = true} : vector<16x1xf32> -> vector<16x1xf32>
    %105 = vector.broadcast %104 : vector<16x1xf32> to vector<16x128xf32>
    %106 = arith.mulf %101, %105 : vector<16x128xf32>
    %107 = arith.mulf %106, %88 : vector<16x128xf32>
    %cst_43 = arith.constant 1.000000e+00 : f32
    %108 = vector.broadcast %cst_43 : f32 to vector<16x128xf32>
    %109 = arith.subf %108, %106 : vector<16x128xf32>
    %110 = arith.mulf %106, %109 : vector<16x128xf32>
    %111 = arith.mulf %110, %88 : vector<16x128xf32>
    %112 = arith.mulf %111, %88 : vector<16x128xf32>
    %cst_44 = arith.constant 9.99999974E-6 : f32
    %113 = vector.broadcast %cst_44 : f32 to vector<16x128xf32>
    %114 = arith.addf %112, %113 : vector<16x128xf32>
    %115 = math.sqrt %114 : vector<16x128xf32>
    %116 = arith.truncf %107 : vector<16x128xf32> to vector<16x128xbf16>
    %cst_45 = arith.constant dense<0.000000e+00> : vector<16x128xf32>
    %117 = tpu.matmul %2, %116, %cst_45 {dimension_numbers = #tpu.dot_dimension_numbers<[1], [0], [0], [1], [0, 0, 1, 1], [], []>} : vector<16x16xbf16>, vector<16x128xbf16>, vector<16x128xf32> -> vector<16x128xf32>
    %118 = arith.truncf %115 : vector<16x128xf32> to vector<16x128xbf16>
    %cst_46 = arith.constant dense<0.000000e+00> : vector<16x128xf32>
    %119 = tpu.matmul %3, %118, %cst_46 {dimension_numbers = #tpu.dot_dimension_numbers<[1], [0], [0], [1], [0, 0, 1, 1], [], []>} : vector<16x16xbf16>, vector<16x128xbf16>, vector<16x128xf32> -> vector<16x128xf32>
    %120 = arith.addf %117, %119 : vector<16x128xf32>
    %121 = vector.broadcast %5 : vector<16x1xf32> to vector<16x128xf32>
    %122 = arith.addf %120, %121 : vector<16x128xf32>
    %cst_47 = arith.constant dense<0.000000e+00> : vector<128xf32>
    %123 = vector.multi_reduction <add>, %122, %cst_47 [0] : vector<16x128xf32> to vector<128xf32>
    %124 = vector.shape_cast %123 : vector<128xf32> to vector<1x128xf32>
    %cst_48 = arith.constant 1.600000e+01 : f32
    %125 = vector.broadcast %cst_48 : f32 to vector<1x128xf32>
    %126 = arith.divf %124, %125 : vector<1x128xf32>
    %127 = vector.broadcast %126 : vector<1x128xf32> to vector<16x128xf32>
    %128 = arith.subf %122, %127 : vector<16x128xf32>
    %129 = vector.broadcast %126 : vector<1x128xf32> to vector<16x128xf32>
    %130 = arith.subf %122, %129 : vector<16x128xf32>
    %131 = arith.mulf %128, %130 : vector<16x128xf32>
    %cst_49 = arith.constant dense<0.000000e+00> : vector<128xf32>
    %132 = vector.multi_reduction <add>, %131, %cst_49 [0] : vector<16x128xf32> to vector<128xf32>
    %133 = vector.shape_cast %132 : vector<128xf32> to vector<1x128xf32>
    %cst_50 = arith.constant 1.600000e+01 : f32
    %134 = vector.broadcast %cst_50 : f32 to vector<1x128xf32>
    %135 = arith.divf %133, %134 : vector<1x128xf32>
    %136 = vector.broadcast %126 : vector<1x128xf32> to vector<16x128xf32>
    %137 = arith.subf %122, %136 : vector<16x128xf32>
    %cst_51 = arith.constant 9.99999974E-6 : f32
    %138 = vector.broadcast %cst_51 : f32 to vector<1x128xf32>
    %139 = arith.addf %135, %138 : vector<1x128xf32>
    %140 = math.rsqrt %139 : vector<1x128xf32>
    %141 = vector.broadcast %140 : vector<1x128xf32> to vector<16x128xf32>
    %142 = arith.mulf %137, %141 : vector<16x128xf32>
    %143 = vector.broadcast %6 : vector<16x1xf32> to vector<16x128xf32>
    %144 = arith.mulf %142, %143 : vector<16x128xf32>
    %145 = vector.broadcast %7 : vector<16x1xf32> to vector<16x128xf32>
    %146 = arith.addf %144, %145 : vector<16x128xf32>
    %c1_52 = arith.constant 1 : index
    %c0_53 = arith.constant 0 : index
    %c0_54 = arith.constant 0 : index
    %147 = vector.load %arg8[%c1_52, %c0_53, %c0_54] : memref<2x16x128xf32, #tpu.memory_space<vmem>>, vector<1x16x128xf32>
    %148 = vector.shape_cast %147 : vector<1x16x128xf32> to vector<16x128xf32>
    %149 = vector.shape_cast %146 : vector<16x128xf32> to vector<1x16x128xf32>
    tpu.vector_store %arg8[%c1_52, %c0_53, %c0_54], %149 {strides = array<i32>} : memref<2x16x128xf32, #tpu.memory_space<vmem>>, vector<1x16x128xf32>,
    return
  }
  func.func @transform_0(%arg0: i32) -> (i32, i32, i32) {
    %c0_i32 = arith.constant 0 : i32
    %c0_i32_0 = arith.constant 0 : i32
    %c0_i32_1 = arith.constant 0 : i32
    return %arg0, %c0_i32, %c0_i32_0 : i32, i32, i32
  }
  func.func @transform_1(%arg0: i32) -> (i32, i32, i32) {
    %c0_i32 = arith.constant 0 : i32
    %c0_i32_0 = arith.constant 0 : i32
    %c0_i32_1 = arith.constant 0 : i32
    return %arg0, %c0_i32, %c0_i32_0 : i32, i32, i32
  }
  func.func @transform_2(%arg0: i32) -> (i32, i32) {
    %c0_i32 = arith.constant 0 : i32
    %c0_i32_0 = arith.constant 0 : i32
    %c0_i32_1 = arith.constant 0 : i32
    return %c0_i32, %c0_i32_0 : i32, i32
  }
  func.func @transform_3(%arg0: i32) -> (i32, i32) {
    %c0_i32 = arith.constant 0 : i32
    %c0_i32_0 = arith.constant 0 : i32
    %c0_i32_1 = arith.constant 0 : i32
    return %c0_i32, %c0_i32_0 : i32, i32
  }
  func.func @transform_4(%arg0: i32) -> (i32, i32) {
    %c0_i32 = arith.constant 0 : i32
    %c0_i32_0 = arith.constant 0 : i32
    %c0_i32_1 = arith.constant 0 : i32
    return %c0_i32, %c0_i32_0 : i32, i32
  }
  func.func @transform_5(%arg0: i32) -> (i32, i32) {
    %c0_i32 = arith.constant 0 : i32
    %c0_i32_0 = arith.constant 0 : i32
    %c0_i32_1 = arith.constant 0 : i32
    return %c0_i32, %c0_i32_0 : i32, i32
  }
  func.func @transform_6(%arg0: i32) -> (i32, i32) {
    %c0_i32 = arith.constant 0 : i32
    %c0_i32_0 = arith.constant 0 : i32
    %c0_i32_1 = arith.constant 0 : i32
    return %c0_i32, %c0_i32_0 : i32, i32
  }
  func.func @transform_7(%arg0: i32) -> (i32, i32, i32) {
    %c0_i32 = arith.constant 0 : i32
    %c0_i32_0 = arith.constant 0 : i32
    %c0_i32_1 = arith.constant 0 : i32
    return %arg0, %c0_i32, %c0_i32_0 : i32, i32, i32
  }
}

</mosaic_0001>

<llo_original>
// kernel: tpu_custom_call.1
$region0: #{tpu_custom_call.1}
  #allocation0 [shape = 'u32[]', space=smem, size = 0x4, offset = 0x4, fixed_abs, tag = 'smem constant byte address 0x4 - core index']
  #allocation1 [shape = 'u32[72,128]{1,0:T(1,128)}', space=vmem, size = 0x9000, scoped, tag = 'internal scratch']
  %s0 = inlined_call_operand.hbm [shape: f32[4,1,128], index: 0, kind: input, shape index: {}]
  %s1 = inlined_call_operand.vmem [shape: bf16[4,16,128], index: 1, kind: input, shape index: {}]
  %s2 = inlined_call_operand.vmem [shape: bf16[32,16], index: 2, kind: input, shape index: {}]
  %s3 = inlined_call_operand.vmem [shape: bf16[16,32], index: 3, kind: input, shape index: {}]
  %s4 = inlined_call_operand.hbm [shape: bf16[16,16], index: 4, kind: input, shape index: {}]
  %s5 = inlined_call_operand.hbm [shape: bf16[16,16], index: 5, kind: input, shape index: {}]
  %s6 = inlined_call_operand.vmem [shape: f32[16,3], index: 6, kind: input, shape index: {}]
  %s7 = inlined_call_operand.hbm [shape: f32[4,16,128], index: 7, kind: output, shape index: {}]
  %s8 = sld [smem:[#allocation0]]
  $region73: #{tpu_custom_call.1} parent=0
    _
  %s10 = ssub.s32 1, %s8
  %s11 = scalar_select 0, %s10, %s8
  $region1: #{tpu_custom_call.1} parent=0
    #allocation2 [shape = 'u8[2048]{0}', space=vmem, size = 0x800, scoped, tag = 'input window, operand 0']
    #allocation3 [shape = 's32[2]{0}', space=sflag, size = 0x8, scoped, tag = 'scoped memory for tpu_custom_call.1']
    #allocation4 [shape = 's32[2]{0}', space=sflag, size = 0x8, scoped, tag = 'scoped memory for tpu_custom_call.1']
    #allocation5 [shape = 'u8[4096]{0}', space=vmem, size = 0x1000, scoped, tag = 'input window, operand 4, single buffered']
    #allocation6 [shape = 's32[1]{0}', space=sflag, size = 0x4, scoped, tag = 'scoped memory for tpu_custom_call.1']
    #allocation7 [shape = 'u8[4096]{0}', space=vmem, size = 0x1000, scoped, tag = 'input window, operand 5, single buffered']
    #allocation8 [shape = 'u8[32768]{0}', space=vmem, size = 0x8000, scoped, tag = 'output window, operand 0']
    %12 = vsyncpa [#allocation3], 0
    %s13 = scalar_lea.sflag [#allocation3], 1
    %14 = vsyncpa %s13, 0
    %15 = vsyncpa [#allocation6], 0
    %16 = vsyncpa [#allocation4], 0
    %s17 = scalar_lea.sflag [#allocation4], 1
    %18 = vsyncpa %s17, 0
    loop: start=0, step=1, limit=4
    $region2: #{tpu_custom_call.1} parent=1 // loop_pre_header
      _
    $region3: #{tpu_custom_call.1} parent=1 // loop_header
      %s20 = sphi 0, %s24
      %p21 = scmp.ge.s32.totalorder %s20, 4
      %s30 = sphi 0, %s32
      %s33 = sphi 0, %s30
      %s34 = sphi 0, %s33
      %s50 = sphi 0, %s34
      %s56 = sphi 0, %s58
      %s59 = sphi 0, %s56
      %s60 = sphi 0, %s59
      %s76 = sphi 0, %s60
      %s80 = sphi 0, %s80
      %s82 = sphi 0, %s80
      %s83 = sphi 0, %s82
      %s97 = sphi 0, %s83
      %s101 = sphi 0, %s101
      %s103 = sphi 0, %s101
      %s104 = sphi 0, %s103
      %s118 = sphi 0, %s104
      %s122 = sphi 0, %s122
      %s124 = sphi 0, %s122
      %s125 = sphi 0, %s124
      %s139 = sphi 0, %s125
      %s143 = sphi 0, %s143
      %s145 = sphi 0, %s143
      %s146 = sphi 0, %s145
      %s160 = sphi 0, %s146
      %s164 = sphi 0, %s164
      %s166 = sphi 0, %s164
      %s167 = sphi 0, %s166
      %s181 = sphi 0, %s167
      %s187 = sphi 0, %s189
      %s190 = sphi 0, %s187
      %s191 = sphi 0, %s190
      %s207 = sphi 0, %s191
    $region4: #{tpu_custom_call.1} parent=1 // loop_header_branch
      %23 = sbr.rel (%p21) target = $region8
    $region5: #{tpu_custom_call.1} parent=1 // loop_body
      %s25 = ssub.s32 %s20, 1
      %s26 = ssub.s32 %s20, 2
      %s27 = sadd.s32 %s20, 1
      %s28 = ssub.s32 %s20, %s27
      %p29 = scmp.eq.s32.totalorder %s28, 0
      %s31 = sadd.s32 %s30, 1
      %s32 = scalar_select %p29, %s30, %s31
      %p35 = pneg %p29
      %p36 = scmp.eq.s32.totalorder %s20, 1
      %p37 = por %p35, %p36
      %p38 = scmp.ne.s32.totalorder %s30, %s33
      %p39 = scmp.eq.s32.totalorder %s20, 0
      %p40 = por %p38, %p39
      %p41 = scmp.ne.s32.totalorder %s30, %s33
      %p42 = scmp.eq.s32.totalorder %s25, 1
      %p43 = por %p41, %p42
      %p44 = scmp.ne.s32.totalorder %s33, %s34
      %p45 = scmp.eq.s32.totalorder %s25, 0
      %p46 = por %p44, %p45
      %p47 = scmp.ne.s32.totalorder %s33, %s34
      %p48 = scmp.eq.s32.totalorder %s26, 1
      %p49 = por %p47, %p48
      %p51 = scmp.ne.s32.totalorder %s34, %s50
      %p52 = scmp.eq.s32.totalorder %s26, 0
      %p53 = por %p51, %p52
      %s54 = ssub.s32 %s20, %s27
      %p55 = scmp.eq.s32.totalorder %s54, 0
      %s57 = sadd.s32 %s56, 1
      %s58 = scalar_select %p55, %s56, %s57
      %p61 = pneg %p55
      %p62 = scmp.eq.s32.totalorder %s20, 1
      %p63 = por %p61, %p62
      %p64 = scmp.ne.s32.totalorder %s56, %s59
      %p65 = scmp.eq.s32.totalorder %s20, 0
      %p66 = por %p64, %p65
      %p67 = scmp.ne.s32.totalorder %s56, %s59
      %p68 = scmp.eq.s32.totalorder %s25, 1
      %p69 = por %p67, %p68
      %p70 = scmp.ne.s32.totalorder %s59, %s60
      %p71 = scmp.eq.s32.totalorder %s25, 0
      %p72 = por %p70, %p71
      %p73 = scmp.ne.s32.totalorder %s59, %s60
      %p74 = scmp.eq.s32.totalorder %s26, 1
      %p75 = por %p73, %p74
      %p77 = scmp.ne.s32.totalorder %s60, %s76
      %p78 = scmp.eq.s32.totalorder %s26, 0
      %p79 = por %p77, %p78
      %s81 = sadd.s32 %s80, 1
      %p84 = scmp.eq.s32.totalorder %s20, 1
      %p85 = scmp.ne.s32.totalorder %s80, %s82
      %p86 = scmp.eq.s32.totalorder %s20, 0
      %p87 = por %p85, %p86
      %p88 = scmp.ne.s32.totalorder %s80, %s82
      %p89 = scmp.eq.s32.totalorder %s25, 1
      %p90 = por %p88, %p89
      %p91 = scmp.ne.s32.totalorder %s82, %s83
      %p92 = scmp.eq.s32.totalorder %s25, 0
      %p93 = por %p91, %p92
      %p94 = scmp.ne.s32.totalorder %s82, %s83
      %p95 = scmp.eq.s32.totalorder %s26, 1
      %p96 = por %p94, %p95
      %p98 = scmp.ne.s32.totalorder %s83, %s97
      %p99 = scmp.eq.s32.totalorder %s26, 0
      %p100 = por %p98, %p99
      %s102 = sadd.s32 %s101, 1
      %p105 = scmp.eq.s32.totalorder %s20, 1
      %p106 = scmp.ne.s32.totalorder %s101, %s103
      %p107 = scmp.eq.s32.totalorder %s20, 0
      %p108 = por %p106, %p107
      %p109 = scmp.ne.s32.totalorder %s101, %s103
      %p110 = scmp.eq.s32.totalorder %s25, 1
      %p111 = por %p109, %p110
      %p112 = scmp.ne.s32.totalorder %s103, %s104
      %p113 = scmp.eq.s32.totalorder %s25, 0
      %p114 = por %p112, %p113
      %p115 = scmp.ne.s32.totalorder %s103, %s104
      %p116 = scmp.eq.s32.totalorder %s26, 1
      %p117 = por %p115, %p116
      %p119 = scmp.ne.s32.totalorder %s104, %s118
      %p120 = scmp.eq.s32.totalorder %s26, 0
      %p121 = por %p119, %p120
      %s123 = sadd.s32 %s122, 1
      %p126 = scmp.eq.s32.totalorder %s20, 1
      %p127 = scmp.ne.s32.totalorder %s122, %s124
      %p128 = scmp.eq.s32.totalorder %s20, 0
      %p129 = por %p127, %p128
      %p130 = scmp.ne.s32.totalorder %s122, %s124
      %p131 = scmp.eq.s32.totalorder %s25, 1
      %p132 = por %p130, %p131
      %p133 = scmp.ne.s32.totalorder %s124, %s125
      %p134 = scmp.eq.s32.totalorder %s25, 0
      %p135 = por %p133, %p134
      %p136 = scmp.ne.s32.totalorder %s124, %s125
      %p137 = scmp.eq.s32.totalorder %s26, 1
      %p138 = por %p136, %p137
      %p140 = scmp.ne.s32.totalorder %s125, %s139
      %p141 = scmp.eq.s32.totalorder %s26, 0
      %p142 = por %p140, %p141
      %s144 = sadd.s32 %s143, 1
      %p147 = scmp.eq.s32.totalorder %s20, 1
      %p148 = scmp.ne.s32.totalorder %s143, %s145
      %p149 = scmp.eq.s32.totalorder %s20, 0
      %p150 = por %p148, %p149
      %p151 = scmp.ne.s32.totalorder %s143, %s145
      %p152 = scmp.eq.s32.totalorder %s25, 1
      %p153 = por %p151, %p152
      %p154 = scmp.ne.s32.totalorder %s145, %s146
      %p155 = scmp.eq.s32.totalorder %s25, 0
      %p156 = por %p154, %p155
      %p157 = scmp.ne.s32.totalorder %s145, %s146
      %p158 = scmp.eq.s32.totalorder %s26, 1
      %p159 = por %p157, %p158
      %p161 = scmp.ne.s32.totalorder %s146, %s160
      %p162 = scmp.eq.s32.totalorder %s26, 0
      %p163 = por %p161, %p162
      %s165 = sadd.s32 %s164, 1
      %p168 = scmp.eq.s32.totalorder %s20, 1
      %p169 = scmp.ne.s32.totalorder %s164, %s166
      %p170 = scmp.eq.s32.totalorder %s20, 0
      %p171 = por %p169, %p170
      %p172 = scmp.ne.s32.totalorder %s164, %s166
      %p173 = scmp.eq.s32.totalorder %s25, 1
      %p174 = por %p172, %p173
      %p175 = scmp.ne.s32.totalorder %s166, %s167
      %p176 = scmp.eq.s32.totalorder %s25, 0
      %p177 = por %p175, %p176
      %p178 = scmp.ne.s32.totalorder %s166, %s167
      %p179 = scmp.eq.s32.totalorder %s26, 1
      %p180 = por %p178, %p179
      %p182 = scmp.ne.s32.totalorder %s167, %s181
      %p183 = scmp.eq.s32.totalorder %s26, 0
      %p184 = por %p182, %p183
      %s185 = ssub.s32 %s20, %s27
      %p186 = scmp.eq.s32.totalorder %s185, 0
      %s188 = sadd.s32 %s187, 1
      %s189 = scalar_select %p186, %s187, %s188
      %p192 = pneg %p186
      %p193 = scmp.eq.s32.totalorder %s20, 1
      %p194 = por %p192, %p193
      %p195 = scmp.ne.s32.totalorder %s187, %s190
      %p196 = scmp.eq.s32.totalorder %s20, 0
      %p197 = por %p195, %p196
      %p198 = scmp.ne.s32.totalorder %s187, %s190
      %p199 = scmp.eq.s32.totalorder %s25, 1
      %p200 = por %p198, %p199
      %p201 = scmp.ne.s32.totalorder %s190, %s191
      %p202 = scmp.eq.s32.totalorder %s25, 0
      %p203 = por %p201, %p202
      %p204 = scmp.ne.s32.totalorder %s190, %s191
      %p205 = scmp.eq.s32.totalorder %s26, 1
      %p206 = por %p204, %p205
      %p208 = scmp.ne.s32.totalorder %s191, %s207
      %p209 = scmp.eq.s32.totalorder %s26, 0
      %p210 = por %p208, %p209
      %p211 = scmp.le.s32.totalorder 1, %s20
      %p212 = scmp.lt.s32.totalorder %s20, 3
      %p213 = pnand %p211, %p212
      %p214 = pneg %p213
      // Predicated region
      $region9: #{tpu_custom_call.1} parent=5 // pred_check
        _
      $region10: #{tpu_custom_call.1} parent=5 // pred_check_branch
        %216 = sbr.rel (%p213) target = $region12
      $region11: #{tpu_custom_call.1} parent=5 // pred_region
        %s217 = ssub.s32 %s20, 1
        // Predicated region
        $region13: #{tpu_custom_call.1} parent=11 // pred_check
          %p218 = pneg %p93
        $region14: #{tpu_custom_call.1} parent=11 // pred_check_branch
          %220 = sbr.rel (%p218) target = $region16
        $region15: #{tpu_custom_call.1} parent=11 // pred_region
          _
        $region16: #{tpu_custom_call.1} parent=11 // pred_fallthru
          _
        // Predicated region
        $region17: #{tpu_custom_call.1} parent=11 // pred_check
          %p221 = pneg %p114
        $region18: #{tpu_custom_call.1} parent=11 // pred_check_branch
          %223 = sbr.rel (%p221) target = $region20
        $region19: #{tpu_custom_call.1} parent=11 // pred_region
          _
        $region20: #{tpu_custom_call.1} parent=11 // pred_fallthru
          _
        // Predicated region
        $region21: #{tpu_custom_call.1} parent=11 // pred_check
          %p224 = pneg %p135
        $region22: #{tpu_custom_call.1} parent=11 // pred_check_branch
          %226 = sbr.rel (%p224) target = $region24
        $region23: #{tpu_custom_call.1} parent=11 // pred_region
          %228 = vsyncadd [#allocation6], 0
          %s229 = sshll.u32 %s4, 4
          %s230 = int_to_ptr.hbm [resolvable:$true] %s229
          %s231 = sshll.u32 [#allocation5], 4
          %s232 = int_to_ptr.vmem [resolvable:$true] %s231
          %237 = dma.hbm_to_vmem [thread:$0]  %s230, 128, %s232, [#allocation6], 64, 64, 4
        $region24: #{tpu_custom_call.1} parent=11 // pred_fallthru
          _
        // Predicated region
        $region25: #{tpu_custom_call.1} parent=11 // pred_check
          %p238 = pneg %p156
        $region26: #{tpu_custom_call.1} parent=11 // pred_check_branch
          %240 = sbr.rel (%p238) target = $region28
        $region27: #{tpu_custom_call.1} parent=11 // pred_region
          %242 = vsyncadd [#allocation6], 0
          %s243 = sshll.u32 %s5, 4
          %s244 = int_to_ptr.hbm [resolvable:$true] %s243
          %s245 = sshll.u32 [#allocation7], 4
          %s246 = int_to_ptr.vmem [resolvable:$true] %s245
          %251 = dma.hbm_to_vmem [thread:$0]  %s244, 128, %s246, [#allocation6], 64, 64, 4
        $region28: #{tpu_custom_call.1} parent=11 // pred_fallthru
          _
        // Predicated region
        $region29: #{tpu_custom_call.1} parent=11 // pred_check
          %p252 = pneg %p177
        $region30: #{tpu_custom_call.1} parent=11 // pred_check_branch
          %254 = sbr.rel (%p252) target = $region32
        $region31: #{tpu_custom_call.1} parent=11 // pred_region
          _
        $region32: #{tpu_custom_call.1} parent=11 // pred_fallthru
          _
      $region12: #{tpu_custom_call.1} parent=5 // pred_fallthru
        _
      %p255 = scmp.lt.s32.totalorder %s20, 2
      // Predicated region
      $region33: #{tpu_custom_call.1} parent=5 // pred_check
        %p256 = pneg %p255
      $region34: #{tpu_custom_call.1} parent=5 // pred_check_branch
        %258 = sbr.rel (%p256) target = $region36
      $region35: #{tpu_custom_call.1} parent=5 // pred_region
        // Predicated region
        $region37: #{tpu_custom_call.1} parent=35 // pred_check
          %p259 = pneg %p40
        $region38: #{tpu_custom_call.1} parent=35 // pred_check_branch
          %261 = sbr.rel (%p259) target = $region40
        $region39: #{tpu_custom_call.1} parent=35 // pred_region
          %s262 = sand.u32 %s30, 1
          %s263 = scalar_lea.sflag [#allocation3], %s262
          %s264 = sand.u32 %s30, 1
          %s265 = smul.addr %s264, 2
          %s266 = scalar_lea.vmem [#allocation2], %s265
          %s267 = smul.u32 2, %s20
          %269 = vsyncadd %s263, 0
          %s270 = scalar_lea.hbm %s0, %s267
          %s271 = sshll.u32 %s270, 4
          %s272 = int_to_ptr.hbm [resolvable:$true] %s271
          %s273 = sshll.u32 %s266, 4
          %s274 = int_to_ptr.vmem [resolvable:$true] %s273
          %279 = dma.hbm_to_vmem [thread:$0]  %s272, 32, %s274, %s263, 16, 16, 1
        $region40: #{tpu_custom_call.1} parent=35 // pred_fallthru
          _
        // Predicated region
        $region41: #{tpu_custom_call.1} parent=35 // pred_check
          %p280 = pneg %p66
        $region42: #{tpu_custom_call.1} parent=35 // pred_check_branch
          %282 = sbr.rel (%p280) target = $region44
        $region43: #{tpu_custom_call.1} parent=35 // pred_region
          %s283 = smul.u32 2, %s20
          %p284 = scmp.lt.s32.totalorder %s283, 3
          %s285 = scalar_select %p284, %s283, 3
          %s286 = smul.addr %s285, 2
          %s287 = smul.addr %s286, 4
          %s288 = scalar_lea.vmem %s1, %s287
          %s289 = smul.u32 2, %s20
        $region44: #{tpu_custom_call.1} parent=35 // pred_fallthru
          _
      $region36: #{tpu_custom_call.1} parent=5 // pred_fallthru
        _
      %p290 = scmp.le.s32.totalorder 1, %s20
      %p291 = scmp.lt.s32.totalorder %s20, 3
      %p292 = pnand %p290, %p291
      %p293 = pneg %p292
      // Predicated region
      $region45: #{tpu_custom_call.1} parent=5 // pred_check
        _
      $region46: #{tpu_custom_call.1} parent=5 // pred_check_branch
        %295 = sbr.rel (%p292) target = $region48
      $region47: #{tpu_custom_call.1} parent=5 // pred_region
        %s296 = ssub.s32 %s20, 1
        %s297 = sand.u32 %s33, 1
        %s298 = scalar_lea.sflag [#allocation3], %s297
        %s299 = sand.u32 %s33, 1
        %s300 = smul.addr %s299, 2
        %s301 = scalar_lea.vmem [#allocation2], %s300
        // Predicated region
        $region49: #{tpu_custom_call.1} parent=47 // pred_check
          %p302 = pneg %p46
        $region50: #{tpu_custom_call.1} parent=47 // pred_check_branch
          %304 = sbr.rel (%p302) target = $region52
        $region51: #{tpu_custom_call.1} parent=47 // pred_region
          %306 = dma.done %s298, 32
        $region52: #{tpu_custom_call.1} parent=47 // pred_fallthru
          _
        // Predicated region
        $region53: #{tpu_custom_call.1} parent=47 // pred_check
          %p307 = pneg %p135
        $region54: #{tpu_custom_call.1} parent=47 // pred_check_branch
          %309 = sbr.rel (%p307) target = $region56
        $region55: #{tpu_custom_call.1} parent=47 // pred_region
          %311 = dma.done [#allocation6], 128
        $region56: #{tpu_custom_call.1} parent=47 // pred_fallthru
          _
        // Predicated region
        $region57: #{tpu_custom_call.1} parent=47 // pred_check
          %p312 = pneg %p156
        $region58: #{tpu_custom_call.1} parent=47 // pred_check_branch
          %314 = sbr.rel (%p312) target = $region60
        $region59: #{tpu_custom_call.1} parent=47 // pred_region
          %316 = dma.done [#allocation6], 128
        $region60: #{tpu_custom_call.1} parent=47 // pred_fallthru
          _
        %s317 = sand.u32 %s33, 1
        %s318 = scalar_lea.sflag [#allocation3], %s317
        %s319 = sand.u32 %s33, 1
        %s320 = smul.addr %s319, 2
        %s321 = scalar_lea.vmem [#allocation2], %s320
        %p322 = pneg %p46
        %p323 = pneg %p43
        %s324 = smul.u32 2, %s25
        %p325 = scmp.lt.s32.totalorder %s324, 3
        %s326 = scalar_select %p325, %s324, 3
        %s327 = smul.addr %s326, 2
        %s328 = smul.addr %s327, 4
        %s329 = scalar_lea.vmem %s1, %s328
        %p330 = pneg %p72
        %p331 = pneg %p69
        %p332 = pneg %p93
        %p333 = pneg %p90
        %p334 = pneg %p114
        %p335 = pneg %p111
        %p336 = pneg %p135
        %p337 = pneg %p132
        %p338 = pneg %p156
        %p339 = pneg %p153
        %p340 = pneg %p177
        %p341 = pneg %p174
        %p342 = pneg %p203
        %p343 = pneg %p200
        %s344 = sand.u32 %s190, 1
        %s345 = scalar_lea.sflag [#allocation4], %s344
        %s346 = sand.u32 %s190, 1
        %s347 = smul.addr %s346, 32
        %s348 = scalar_lea.vmem [#allocation8], %s347
        %s349 = smul.u32 2, %s25
        %s350 = smul.u32 2, %s25
        %p351 = scmp.lt.s32.totalorder %s350, 3
        %s352 = scalar_select %p351, %s350, 3
        %s353 = smul.addr %s352, 2
        %s354 = smul.addr %s353, 4
        %s355 = scalar_lea.vmem %s1, %s354
        %s356 = smul.u32 2, %s25
        %s357 = smul.u32 2, %s25
        %v359 = vld [vmem:[%s2] sm:$0xf]
        %v360 = vld [vmem:[%s2 + $0x4] sm:$0xf]
        %v361 = vld [vmem:[%s2 + $0x8] sm:$0xf]
        %v362 = vld [vmem:[%s2 + $0xc] sm:$0xf]
        %v363 = vld [vmem:[%s3] sm:$0xf]
        %v364 = vld [vmem:[%s3 + $0x4] sm:$0xf]
        %v365 = vld [vmem:[#allocation5] sm:$0xf]
        %v366 = vld [vmem:[#allocation5 + $0x4] sm:$0xf]
        %v367 = vld [vmem:[#allocation7] sm:$0xf]
        %v368 = vld [vmem:[#allocation7 + $0x4] sm:$0xf]
        %v369 = vld [vmem:[%s6] sm:$0xff]
        %v370 = vld [vmem:[%s6 + $0x8] sm:$0xff]
        %v371 = vld [vmem:[%s301] sm:$0x1]
        %vm372 = vcmp.gt.f32.partialorder %v371, 0.0
        %v373 = vld [vmem:[%s355] sm:$0xf]
        %v374 = vld [vmem:[%s355 + $0x4] sm:$0xf]
        %v375 = vpack.c.bf16 %v371, %v371
        %v377 = vpack.i.b16 %v375, %v375
        %v379 = vperm.slane %v377, 0
        %v380 = vunpack.c.l.bf16 %v373
        %v381 = vunpack.c.l.bf16 %v374
        %v382 = vunpack.c.l.bf16 %v379
        %v383 = vmul.f32 %v380, %v382
        %v384 = vmul.f32 %v381, %v382
        %v385 = vpack.c.bf16 %v383, %v383
        %v386 = vpack.c.bf16 %v384, %v384
        %v387 = vunpack.c.l.bf16 %v385
        %v388 = vunpack.c.l.bf16 %v386
        %v393 = vunpack.c.l.b16 %v359
        %v394 = vunpack.c.l.b16 %v360
        %v395 = vunpack.c.l.b16 %v361
        %v396 = vunpack.c.l.b16 %v362
        %v397 = vpack.c.b16 %v394, %v393
        %v398 = vpack.c.b16 %v396, %v395
        %v401 = vunpack.c.l.b16 %v385
        %v402 = vunpack.c.l.b16 %v386
        %v403 = vpack.c.b16 %v402, %v401
        %vm405 = vcmask 130048
        %v407 = vsel %vm405, %v397, 0
        %v410 = vsel %vm405, %v398, 0
        %412 = vmatpush.bf16.msra.mxu0 0
        %413 = vmatpush.bf16.msra.mxu0 0
        %414 = vmatpush.bf16.msra.mxu0 0
        %415 = vmatpush.bf16.msra.mxu0 0
        %416 = vmatpush.bf16.msra.mxu0 0
        %417 = vmatpush.bf16.msra.mxu0 0
        %418 = vmatpush.bf16.msra.mxu0 0
        %419 = vmatpush.bf16.msra.mxu0 %v403
        %420 = vmatmul.bf16.gmra.mxu0 %v407
        %v421 = vpop.f32.mrf.mxu0
        %v422 = vadd.f32 0.0, %v421
        %v423 = vpop.f32.mrf.mxu0
        %v424 = vadd.f32 0.0, %v423
        %425 = vmatmul.bf16.gmra.mxu0 %v410
        %v426 = vpop.f32.mrf.mxu0
        %v427 = vadd.f32 0.0, %v426
        %v428 = vpop.f32.mrf.mxu0
        %v429 = vadd.f32 0.0, %v428
        %430 = vdwg.mxu0
        %v431 = vtanh.pop %v422
        %v432 = vtanh.pop %v424
        %v433 = vtanh.pop %v427
        %v434 = vtanh.pop %v429
        %v435 = vpack.c.bf16 %v432, %v431
        %v436 = vpack.c.bf16 %v434, %v433
        %v439 = vunpack.c.l.b16 %v363
        %v440 = vunpack.c.l.b16 %v364
        %v441 = vpack.c.b16 %v440, %v439
        %vm442 = vcmask 261120
        %v444 = vsel %vm442, %v441, 0
        %446 = vmatpush.bf16.msra.mxu0 0
        %447 = vmatpush.bf16.msra.mxu0 0
        %448 = vmatpush.bf16.msra.mxu0 0
        %449 = vmatpush.bf16.msra.mxu0 0
        %450 = vmatpush.bf16.msra.mxu0 0
        %451 = vmatpush.bf16.msra.mxu0 0
        %452 = vmatpush.bf16.msra.mxu0 %v436
        %453 = vmatpush.bf16.msra.mxu0 %v435
        %454 = vmatmul.bf16.gmra.mxu0 %v444
        %v455 = vpop.f32.mrf.mxu0
        %v456 = vadd.f32 0.0, %v455
        %v457 = vpop.f32.mrf.mxu0
        %v458 = vadd.f32 0.0, %v457
        %459 = vdwg.mxu0
        %v460 = vsel %vm372, 1, 0
        %v461 = vperm.slane %v460, 0
        %vm462 = vcmp.eq.s32.totalorder %v461, 1
        %v463 = vsel %vm462, %v456, -1000.0
        %v464 = vsel %vm462, %v458, -1000.0
        %465 = vmax.xlane.f32.xlu0 %v463
        %v466 = vpop.xlane.xlu0 %465
        %467 = vmax.xlane.f32.xlu0 %v464
        %v468 = vpop.xlane.xlu0 %467
        %v469 = vsub.f32 %v463, %v466
        %v470 = vsub.f32 %v464, %v468
        %v471 = vmul.f32 %v469, 1.442695
        %v472 = vpow.pop %v471
        %v473 = vmul.f32 %v470, 1.442695
        %v474 = vpow.pop %v473
        %475 = vadd.xlane.f32.xlu0 %v472
        %v476 = vpop.xlane.xlu0 %475
        %477 = vadd.xlane.f32.xlu0 %v474
        %v478 = vpop.xlane.xlu0 %477
        %v479 = vrcp.pop %v476
        %v480 = vrcp.pop %v478
        %v481 = vmul.f32 %v472, %v479
        %v482 = vmul.f32 %v474, %v480
        %v483 = vmul.f32 %v481, %v387
        %v484 = vmul.f32 %v482, %v388
        %v485 = vsub.f32 1.0, %v481
        %v486 = vsub.f32 1.0, %v482
        %v487 = vmul.f32 %v481, %v485
        %v488 = vmul.f32 %v482, %v486
        %v489 = vmul.f32 %v487, %v387
        %v490 = vmul.f32 %v488, %v388
        %v491 = vmul.f32 %v489, %v387
        %v492 = vmul.f32 %v490, %v388
        %v493 = vadd.f32 %v491, 1e-05
        %v494 = vadd.f32 %v492, 1e-05
        %v495 = vrsqrt.pop %v493
        %v496 = vmul.f32 %v495, %v493
        %v497 = vmul.f32 %v496, %v495
        %v498 = vmul.f32 0.5, %v497
        %v499 = vsub.f32 1.5, %v498
        %v500 = vmul.f32 %v495, %v499
        %v501 = vmul.f32 %v493, %v500
        %vm502 = vcmp.eq.f32.partialorder %v493, inf
        %v503 = vsel %vm502, %v493, %v501
        %vm504 = vcmp.eq.f32.partialorder %v493, 0.0
        %v505 = vand.u32 %v493, 2147483648
        %v506 = vsel %vm504, %v505, %v503
        %v507 = vrsqrt.pop %v494
        %v508 = vmul.f32 %v507, %v494
        %v509 = vmul.f32 %v508, %v507
        %v510 = vmul.f32 0.5, %v509
        %v511 = vsub.f32 1.5, %v510
        %v512 = vmul.f32 %v507, %v511
        %v513 = vmul.f32 %v494, %v512
        %vm514 = vcmp.eq.f32.partialorder %v494, inf
        %v515 = vsel %vm514, %v494, %v513
        %vm516 = vcmp.eq.f32.partialorder %v494, 0.0
        %v517 = vand.u32 %v494, 2147483648
        %v518 = vsel %vm516, %v517, %v515
        %v519 = vpack.c.bf16 %v484, %v483
        %v520 = vpack.c.bf16 %v518, %v506
        %v523 = vunpack.c.l.b16 %v367
        %v524 = vunpack.c.l.b16 %v368
        %v525 = vpack.c.b16 %v524, %v523
        %v527 = vsel %vm405, %v525, 0
        %529 = vmatpush.bf16.msra.mxu0 0
        %530 = vmatpush.bf16.msra.mxu0 0
        %531 = vmatpush.bf16.msra.mxu0 0
        %532 = vmatpush.bf16.msra.mxu0 0
        %533 = vmatpush.bf16.msra.mxu0 0
        %534 = vmatpush.bf16.msra.mxu0 0
        %535 = vmatpush.bf16.msra.mxu0 0
        %536 = vmatpush.bf16.msra.mxu0 %v520
        %537 = vmatmul.bf16.gmra.mxu0 %v527
        %v538 = vpop.f32.mrf.mxu0
        %v539 = vadd.f32 0.0, %v538
        %v540 = vpop.f32.mrf.mxu0
        %v541 = vadd.f32 0.0, %v540
        %542 = vdwg.mxu0
        %v545 = vunpack.c.l.b16 %v365
        %v546 = vunpack.c.l.b16 %v366
        %v547 = vpack.c.b16 %v546, %v545
        %v549 = vsel %vm405, %v547, 0
        %551 = vmatpush.bf16.msra.mxu0 0
        %552 = vmatpush.bf16.msra.mxu0 0
        %553 = vmatpush.bf16.msra.mxu0 0
        %554 = vmatpush.bf16.msra.mxu0 0
        %555 = vmatpush.bf16.msra.mxu0 0
        %556 = vmatpush.bf16.msra.mxu0 0
        %557 = vmatpush.bf16.msra.mxu0 0
        %558 = vmatpush.bf16.msra.mxu0 %v519
        %559 = vmatmul.bf16.gmra.mxu0 %v549
        %v560 = vpop.f32.mrf.mxu0
        %v561 = vadd.f32 %v539, %v560
        %v562 = vpop.f32.mrf.mxu0
        %v563 = vadd.f32 %v541, %v562
        %564 = vdwg.mxu0
        %566 = vset.pattern.permute.xlu0 0
        %567 = vperm.xlu0 %566, %v369
        %v568 = vpop.permute.xlu0 %567
        %571 = vset.pattern.permute.xlu0 0
        %572 = vperm.xlu0 %571, %v370
        %v573 = vpop.permute.xlu0 %572
        %v575 = vadd.f32 %v561, %v568
        %v576 = vadd.f32 %v563, %v573
        %v577 = vadd.f32 %v575, %v576
        %v578 = vrot.slane %v577, 4
        %v579 = vadd.f32 %v577, %v578
        %v580 = vrot.slane %v579, 2
        %v581 = vadd.f32 %v579, %v580
        %v582 = vrot.slane %v581, 1
        %v583 = vadd.f32 %v581, %v582
        %v584 = vrcp.pop 16.0
        %v585 = vmul.f32 16.0, %v584
        %v586 = vsub.f32 1.0, %v585
        %v587 = vmul.f32 %v584, %v586
        %v588 = vadd.f32 %v584, %v587
        %vm589 = vweird.f32 %v584
        %v590 = vsel %vm589, %v584, %v588
        %v591 = vmul.f32 %v583, %v590
        %v592 = vsub.f32 %v575, %v591
        %v593 = vsub.f32 %v576, %v591
        %v594 = vmul.f32 %v592, %v592
        %v595 = vmul.f32 %v593, %v593
        %v596 = vadd.f32 %v594, %v595
        %v597 = vrot.slane %v596, 4
        %v598 = vadd.f32 %v596, %v597
        %v599 = vrot.slane %v598, 2
        %v600 = vadd.f32 %v598, %v599
        %v601 = vrot.slane %v600, 1
        %v602 = vadd.f32 %v600, %v601
        %v603 = vmul.f32 %v602, %v590
        %v604 = vadd.f32 %v603, 1e-05
        %v605 = vrsqrt.pop %v604
        %v606 = vmul.f32 %v605, %v604
        %v607 = vmul.f32 %v606, %v605
        %v608 = vmul.f32 0.5, %v607
        %v609 = vsub.f32 1.5, %v608
        %v610 = vmul.f32 %v605, %v609
        %vm611 = vweird.f32 %v604
        %vm612 = vweird.f32 %v605
        %vm613 = vmor %vm611, %vm612
        %v614 = vsel %vm613, %v605, %v610
        %v615 = vmul.f32 %v592, %v614
        %v616 = vmul.f32 %v593, %v614
        %617 = vset.pattern.permute.xlu0 1
        %618 = vperm.xlu0 %617, %v369
        %v619 = vpop.permute.xlu0 %618
        %621 = vset.pattern.permute.xlu0 1
        %622 = vperm.xlu0 %621, %v370
        %v623 = vpop.permute.xlu0 %622
        %v625 = vmul.f32 %v615, %v619
        %v626 = vmul.f32 %v616, %v623
        %627 = vset.pattern.permute.xlu0 2
        %628 = vperm.xlu0 %627, %v369
        %v629 = vpop.permute.xlu0 %628
        %631 = vset.pattern.permute.xlu0 2
        %632 = vperm.xlu0 %631, %v370
        %v633 = vpop.permute.xlu0 %632
        %v635 = vadd.f32 %v625, %v629
        %v636 = vadd.f32 %v626, %v633
        %637 = vst [vmem:[%s348] sm:$0xff] %v635
        %638 = vst [vmem:[%s348 + $0x8] sm:$0xff] %v636
        %s639 = scalar_lea.vmem %s301, 1 [#allocation2]
        %v640 = vld [vmem:[%s639] sm:$0x1]
        %vm641 = vcmp.gt.f32.partialorder %v640, 0.0
        %s642 = scalar_lea.vmem %s355, 8
        %v643 = vld [vmem:[%s642] sm:$0xf]
        %v644 = vld [vmem:[%s642 + $0x4] sm:$0xf]
        %v645 = vpack.c.bf16 %v640, %v640
        %v647 = vpack.i.b16 %v645, %v645
        %v649 = vperm.slane %v647, 0
        %v650 = vunpack.c.l.bf16 %v643
        %v651 = vunpack.c.l.bf16 %v644
        %v652 = vunpack.c.l.bf16 %v649
        %v653 = vmul.f32 %v650, %v652
        %v654 = vmul.f32 %v651, %v652
        %v655 = vpack.c.bf16 %v653, %v653
        %v656 = vpack.c.bf16 %v654, %v654
        %v657 = vunpack.c.l.bf16 %v655
        %v658 = vunpack.c.l.bf16 %v656
        %v661 = vunpack.c.l.b16 %v655
        %v662 = vunpack.c.l.b16 %v656
        %v663 = vpack.c.b16 %v662, %v661
        %665 = vmatpush.bf16.msra.mxu0 0
        %666 = vmatpush.bf16.msra.mxu0 0
        %667 = vmatpush.bf16.msra.mxu0 0
        %668 = vmatpush.bf16.msra.mxu0 0
        %669 = vmatpush.bf16.msra.mxu0 0
        %670 = vmatpush.bf16.msra.mxu0 0
        %671 = vmatpush.bf16.msra.mxu0 0
        %672 = vmatpush.bf16.msra.mxu0 %v663
        %673 = vmatmul.bf16.gmra.mxu0 %v407
        %v674 = vpop.f32.mrf.mxu0
        %v675 = vadd.f32 0.0, %v674
        %v676 = vpop.f32.mrf.mxu0
        %v677 = vadd.f32 0.0, %v676
        %678 = vmatmul.bf16.gmra.mxu0 %v410
        %v679 = vpop.f32.mrf.mxu0
        %v680 = vadd.f32 0.0, %v679
        %v681 = vpop.f32.mrf.mxu0
        %v682 = vadd.f32 0.0, %v681
        %683 = vdwg.mxu0
        %v684 = vtanh.pop %v675
        %v685 = vtanh.pop %v677
        %v686 = vtanh.pop %v680
        %v687 = vtanh.pop %v682
        %v688 = vpack.c.bf16 %v685, %v684
        %v689 = vpack.c.bf16 %v687, %v686
        %690 = vmatpush.bf16.msra.mxu0 0
        %691 = vmatpush.bf16.msra.mxu0 0
        %692 = vmatpush.bf16.msra.mxu0 0
        %693 = vmatpush.bf16.msra.mxu0 0
        %694 = vmatpush.bf16.msra.mxu0 0
        %695 = vmatpush.bf16.msra.mxu0 0
        %696 = vmatpush.bf16.msra.mxu0 %v689
        %697 = vmatpush.bf16.msra.mxu0 %v688
        %698 = vmatmul.bf16.gmra.mxu0 %v444
        %v699 = vpop.f32.mrf.mxu0
        %v700 = vadd.f32 0.0, %v699
        %v701 = vpop.f32.mrf.mxu0
        %v702 = vadd.f32 0.0, %v701
        %703 = vdwg.mxu0
        %v704 = vsel %vm641, 1, 0
        %v705 = vperm.slane %v704, 0
        %vm706 = vcmp.eq.s32.totalorder %v705, 1
        %v707 = vsel %vm706, %v700, -1000.0
        %v708 = vsel %vm706, %v702, -1000.0
        %709 = vmax.xlane.f32.xlu0 %v707
        %v710 = vpop.xlane.xlu0 %709
        %711 = vmax.xlane.f32.xlu0 %v708
        %v712 = vpop.xlane.xlu0 %711
        %v713 = vsub.f32 %v707, %v710
        %v714 = vsub.f32 %v708, %v712
        %v715 = vmul.f32 %v713, 1.442695
        %v716 = vpow.pop %v715
        %v717 = vmul.f32 %v714, 1.442695
        %v718 = vpow.pop %v717
        %719 = vadd.xlane.f32.xlu0 %v716
        %v720 = vpop.xlane.xlu0 %719
        %721 = vadd.xlane.f32.xlu0 %v718
        %v722 = vpop.xlane.xlu0 %721
        %v723 = vrcp.pop %v720
        %v724 = vrcp.pop %v722
        %v725 = vmul.f32 %v716, %v723
        %v726 = vmul.f32 %v718, %v724
        %v727 = vmul.f32 %v725, %v657
        %v728 = vmul.f32 %v726, %v658
        %v729 = vsub.f32 1.0, %v725
        %v730 = vsub.f32 1.0, %v726
        %v731 = vmul.f32 %v725, %v729
        %v732 = vmul.f32 %v726, %v730
        %v733 = vmul.f32 %v731, %v657
        %v734 = vmul.f32 %v732, %v658
        %v735 = vmul.f32 %v733, %v657
        %v736 = vmul.f32 %v734, %v658
        %v737 = vadd.f32 %v735, 1e-05
        %v738 = vadd.f32 %v736, 1e-05
        %v739 = vrsqrt.pop %v737
        %v740 = vmul.f32 %v739, %v737
        %v741 = vmul.f32 %v740, %v739
        %v742 = vmul.f32 0.5, %v741
        %v743 = vsub.f32 1.5, %v742
        %v744 = vmul.f32 %v739, %v743
        %v745 = vmul.f32 %v737, %v744
        %vm746 = vcmp.eq.f32.partialorder %v737, inf
        %v747 = vsel %vm746, %v737, %v745
        %vm748 = vcmp.eq.f32.partialorder %v737, 0.0
        %v749 = vand.u32 %v737, 2147483648
        %v750 = vsel %vm748, %v749, %v747
        %v751 = vrsqrt.pop %v738
        %v752 = vmul.f32 %v751, %v738
        %v753 = vmul.f32 %v752, %v751
        %v754 = vmul.f32 0.5, %v753
        %v755 = vsub.f32 1.5, %v754
        %v756 = vmul.f32 %v751, %v755
        %v757 = vmul.f32 %v738, %v756
        %vm758 = vcmp.eq.f32.partialorder %v738, inf
        %v759 = vsel %vm758, %v738, %v757
        %vm760 = vcmp.eq.f32.partialorder %v738, 0.0
        %v761 = vand.u32 %v738, 2147483648
        %v762 = vsel %vm760, %v761, %v759
        %v763 = vpack.c.bf16 %v728, %v727
        %v764 = vpack.c.bf16 %v762, %v750
        %765 = vmatpush.bf16.msra.mxu0 0
        %766 = vmatpush.bf16.msra.mxu0 0
        %767 = vmatpush.bf16.msra.mxu0 0
        %768 = vmatpush.bf16.msra.mxu0 0
        %769 = vmatpush.bf16.msra.mxu0 0
        %770 = vmatpush.bf16.msra.mxu0 0
        %771 = vmatpush.bf16.msra.mxu0 0
        %772 = vmatpush.bf16.msra.mxu0 %v764
        %773 = vmatmul.bf16.gmra.mxu0 %v527
        %v774 = vpop.f32.mrf.mxu0
        %v775 = vadd.f32 0.0, %v774
        %v776 = vpop.f32.mrf.mxu0
        %v777 = vadd.f32 0.0, %v776
        %778 = vdwg.mxu0
        %779 = vmatpush.bf16.msra.mxu0 0
        %780 = vmatpush.bf16.msra.mxu0 0
        %781 = vmatpush.bf16.msra.mxu0 0
        %782 = vmatpush.bf16.msra.mxu0 0
        %783 = vmatpush.bf16.msra.mxu0 0
        %784 = vmatpush.bf16.msra.mxu0 0
        %785 = vmatpush.bf16.msra.mxu0 0
        %786 = vmatpush.bf16.msra.mxu0 %v763
        %787 = vmatmul.bf16.gmra.mxu0 %v549
        %v788 = vpop.f32.mrf.mxu0
        %v789 = vadd.f32 %v775, %v788
        %v790 = vpop.f32.mrf.mxu0
        %v791 = vadd.f32 %v777, %v790
        %792 = vdwg.mxu0
        %v793 = vadd.f32 %v789, %v568
        %v794 = vadd.f32 %v791, %v573
        %v795 = vadd.f32 %v793, %v794
        %v796 = vrot.slane %v795, 4
        %v797 = vadd.f32 %v795, %v796
        %v798 = vrot.slane %v797, 2
        %v799 = vadd.f32 %v797, %v798
        %v800 = vrot.slane %v799, 1
        %v801 = vadd.f32 %v799, %v800
        %v802 = vmul.f32 %v801, %v590
        %v803 = vsub.f32 %v793, %v802
        %v804 = vsub.f32 %v794, %v802
        %v805 = vmul.f32 %v803, %v803
        %v806 = vmul.f32 %v804, %v804
        %v807 = vadd.f32 %v805, %v806
        %v808 = vrot.slane %v807, 4
        %v809 = vadd.f32 %v807, %v808
        %v810 = vrot.slane %v809, 2
        %v811 = vadd.f32 %v809, %v810
        %v812 = vrot.slane %v811, 1
        %v813 = vadd.f32 %v811, %v812
        %v814 = vmul.f32 %v813, %v590
        %v815 = vadd.f32 %v814, 1e-05
        %v816 = vrsqrt.pop %v815
        %v817 = vmul.f32 %v816, %v815
        %v818 = vmul.f32 %v817, %v816
        %v819 = vmul.f32 0.5, %v818
        %v820 = vsub.f32 1.5, %v819
        %v821 = vmul.f32 %v816, %v820
        %vm822 = vweird.f32 %v815
        %vm823 = vweird.f32 %v816
        %vm824 = vmor %vm822, %vm823
        %v825 = vsel %vm824, %v816, %v821
        %v826 = vmul.f32 %v803, %v825
        %v827 = vmul.f32 %v804, %v825
        %v828 = vmul.f32 %v826, %v619
        %v829 = vmul.f32 %v827, %v623
        %v830 = vadd.f32 %v828, %v629
        %v831 = vadd.f32 %v829, %v633
        %s832 = scalar_lea.vmem %s348, 16 [#allocation8]
        %833 = vst [vmem:[%s832] sm:$0xff] %v830
        %834 = vst [vmem:[%s832 + $0x8] sm:$0xff] %v831
        %s835 = sand.u32 %s190, 1
        %s836 = scalar_lea.sflag [#allocation4], %s835
        %s837 = sand.u32 %s190, 1
        %s838 = smul.addr %s837, 32
        %s839 = scalar_lea.vmem [#allocation8], %s838
        // Predicated region
        $region61: #{tpu_custom_call.1} parent=47 // pred_check
          %p840 = pneg %p200
        $region62: #{tpu_custom_call.1} parent=47 // pred_check_branch
          %842 = sbr.rel (%p840) target = $region64
        $region63: #{tpu_custom_call.1} parent=47 // pred_region
          %s843 = smul.u32 2, %s25
          %845 = vsyncadd %s836, 0
          %s846 = smul.addr %s843, 2
          %s847 = smul.addr %s846, 8
          %s848 = scalar_lea.hbm %s7, %s847
          %s849 = sshll.u32 %s839, 4
          %s850 = int_to_ptr.vmem [resolvable:$true] %s849
          %s851 = sshll.u32 %s848, 4
          %s852 = int_to_ptr.hbm [resolvable:$true] %s851
          %857 = dma.vmem_to_hbm [thread:$0]  %s850, 512, %s852, %s836, 128, 128, 8
        $region64: #{tpu_custom_call.1} parent=47 // pred_fallthru
          _
      $region48: #{tpu_custom_call.1} parent=5 // pred_fallthru
        _
      %p858 = scmp.le.s32.totalorder 2, %s20
      // Predicated region
      $region65: #{tpu_custom_call.1} parent=5 // pred_check
        %p859 = pneg %p858
      $region66: #{tpu_custom_call.1} parent=5 // pred_check_branch
        %861 = sbr.rel (%p859) target = $region68
      $region67: #{tpu_custom_call.1} parent=5 // pred_region
        %s862 = ssub.s32 %s20, 2
        // Predicated region
        $region69: #{tpu_custom_call.1} parent=67 // pred_check
          %p863 = pneg %p206
        $region70: #{tpu_custom_call.1} parent=67 // pred_check_branch
          %865 = sbr.rel (%p863) target = $region72
        $region71: #{tpu_custom_call.1} parent=67 // pred_region
          %s866 = sand.u32 %s191, 1
          %s867 = scalar_lea.sflag [#allocation4], %s866
          %s868 = sand.u32 %s191, 1
          %s869 = smul.addr %s868, 32
          %s870 = scalar_lea.vmem [#allocation8], %s869
          %872 = dma.done %s867, 512
        $region72: #{tpu_custom_call.1} parent=67 // pred_fallthru
          _
      $region68: #{tpu_custom_call.1} parent=5 // pred_fallthru
        _
    $region6: #{tpu_custom_call.1} parent=1 // loop_footer
      %s24 = sadd.s32 1, %s20
    $region7: #{tpu_custom_call.1} parent=1 // loop_footer_branch
      %19 = sbr.rel target = $region3
    $region8: #{tpu_custom_call.1} parent=1 // loop_exit
      _
    %873 = vsyncpa [#allocation3], 1
    %s874 = scalar_lea.sflag [#allocation3], 1
    %875 = vsyncpa %s874, 1
    %876 = vsyncpa [#allocation6], 1
    %877 = vsyncpa [#allocation4], 1
    %s878 = scalar_lea.sflag [#allocation4], 1
    %879 = vsyncpa %s878, 1

</llo_original>
